<compile_context>
chip_gen: v7x
topology: tpu7x:2x2x1
jax: 0.10.0
libtpu: 0.0.40
codegen_flags: <defaults>
</compile_context>

<pallas_src>
import functools

import jax
import jax.numpy as jnp
import numpy as np
from jax.experimental import pallas as pl
from jax.experimental.pallas import tpu as pltpu


def _dwsep_kernel(x_ref, w_ref, b_ref, m_ref, o_ref, xext_ref, patches_ref, *, width):
    """One batch image of fused depthwise-3x3 + pointwise-1x1 + leaky_relu(0.2).

    x_ref      : (1, Cin, H*W)            image, H*W flattened on the lane axis
    w_ref      : (Cout, 9*Cin)            folded weights (row k = tap*Cin + cin)
    b_ref      : (Cout, 1)                folded bias (f32)
    m_ref      : (9*Cin, H*W)             0/1 border-validity mask per (tap, cin) row
    o_ref      : (1, Cout, H*W)
    xext_ref   : (Cin, H*W + 2*(width+1)) scratch: zero-halo'd flat image
    patches_ref: (9*Cin, H*W)             scratch: im2col matrix
    """
    cin = x_ref.shape[1]
    hw = x_ref.shape[2]
    halo = width + 1

    # Zero-halo'd flattened image: [0]*(W+1) ++ x ++ [0]*(W+1). "same" padding
    # happens here in VMEM — no padded copy of the activation in HBM.
    xext_ref[...] = jnp.zeros(xext_ref.shape, xext_ref.dtype)
    xext_ref[:, halo:halo + hw] = x_ref[0]

    # im2col: tap (ky, kx) is the image shifted by (ky-1)*W + (kx-1) in flattened
    # index space; it fills rows t*Cin .. t*Cin+Cin-1 of the patch matrix.
    for ky in range(3):
        for kx in range(3):
            t = ky * 3 + kx
            s = (ky - 1) * width + (kx - 1)
            patches_ref[t * cin:(t + 1) * cin, :] = xext_ref[:, halo + s:halo + s + hw]

    # Zero the taps that cross the image border (row wrap / top / bottom rows).
    patches = patches_ref[...] * m_ref[...]

    # One MXU matmul: (Cout, 9*Cin) x (9*Cin, H*W) -> (Cout, H*W), lane-dense output.
    acc = jnp.dot(w_ref[...], patches, preferred_element_type=jnp.float32)
    acc = acc + b_ref[...]                        # folded depthwise+pointwise bias
    acc = jnp.where(acc >= 0.0, acc, 0.2 * acc)   # leaky_relu(negative_slope=0.2)
    o_ref[0] = acc.astype(o_ref.dtype)


def _tap_masks(h, w):
    """(9, H*W) 0/1 masks: mask[t, y*W+x] = 1 iff tap (dy,dx)=(t//3-1, t%3-1) is in-bounds."""
    yy, xx = np.meshgrid(np.arange(h), np.arange(w), indexing="ij")
    rows = []
    for ky in range(3):
        for kx in range(3):
            dy, dx = ky - 1, kx - 1
            ok = (yy + dy >= 0) & (yy + dy < h) & (xx + dx >= 0) & (xx + dx < w)
            rows.append(ok.reshape(-1))
    return np.stack(rows).astype(np.float32)


def depthwise_conv(x, dw_w, dw_b, pw_w, pw_b):
    """DepthWiseConv forward.

    x    : (N, Cin, H, W)  NCHW, same as the PyTorch module
    dw_w : (Cin, 3, 3)     depth_conv.weight  (PyTorch (Cin,1,3,3) squeezed)
    dw_b : (Cin,)          depth_conv.bias
    pw_w : (Cout, Cin)     point_conv.weight  (PyTorch (Cout,Cin,1,1) squeezed)
    pw_b : (Cout,)         point_conv.bias
    returns (N, Cout, H, W)
    """
    N, Cin, H, W = x.shape
    Cout = pw_w.shape[0]
    HW = H * W

    # Fold depthwise into pointwise (trace-time, negligible cost).
    w_eff = jnp.einsum("oc,cyx->oyxc",
                       pw_w.astype(jnp.float32),
                       dw_w.astype(jnp.float32)).reshape(Cout, 9 * Cin).astype(x.dtype)
    b_eff = (pw_w.astype(jnp.float32) @ dw_b.astype(jnp.float32)
             + pw_b.astype(jnp.float32)).reshape(Cout, 1)

    # Border-validity masks, one row per (tap, cin), matching the im2col row order.
    mexp = jnp.asarray(np.repeat(_tap_masks(H, W), Cin, axis=0), dtype=x.dtype)

    x_flat = x.reshape(N, Cin, HW)   # free metadata-only reshape of contiguous NCHW

    out = pl.pallas_call(
        functools.partial(_dwsep_kernel, width=W),
        out_shape=jax.ShapeDtypeStruct((N, Cout, HW), x.dtype),
        grid_spec=pltpu.PrefetchScalarGridSpec(
            num_scalar_prefetch=0,
            grid=(N,),
            in_specs=[
                pl.BlockSpec((1, Cin, HW), lambda n: (n, 0, 0)),      # activations
                pl.BlockSpec((Cout, 9 * Cin), lambda n: (0, 0)),      # folded weights
                pl.BlockSpec((Cout, 1), lambda n: (0, 0)),            # folded bias
                pl.BlockSpec((9 * Cin, HW), lambda n: (0, 0)),        # tap masks
            ],
            out_specs=pl.BlockSpec((1, Cout, HW), lambda n: (n, 0, 0)),
            scratch_shapes=[
                pltpu.VMEM((Cin, HW + 2 * (W + 1)), x.dtype),         # zero-halo image
                pltpu.VMEM((9 * Cin, HW), x.dtype),                   # im2col matrix
            ],
        ),
        # Tiles are tiny here, so default scoped VMEM is plenty; set vmem_limit_bytes
        # and add an H-tile (2-row halo) grid axis for production-sized images.
        compiler_params=pltpu.CompilerParams(
            dimension_semantics=("parallel",)),
    )(x_flat, w_eff, b_eff, mexp)

    return out.reshape(N, Cout, H, W)


def _reference(x, dw_w, dw_b, pw_w, pw_b):
    """Pure-JAX reference matching the PyTorch forward (NCHW)."""
    n, cin, h, w = x.shape
    xp = jnp.pad(x, ((0, 0), (0, 0), (1, 1), (1, 1)))
    dw = jnp.zeros_like(x)
    for ky in range(3):
        for kx in range(3):
            dw = dw + xp[:, :, ky:ky + h, kx:kx + w] * dw_w[:, ky, kx][None, :, None, None]
    dw = dw + dw_b[None, :, None, None]
    out = jnp.einsum("oc,nchw->nohw", pw_w, dw) + pw_b[None, :, None, None]
    return jnp.where(out >= 0, out, 0.2 * out)


if __name__ == "__main__":
    key = jax.random.PRNGKey(0)
    k_x, k1, k2, k3, k4 = jax.random.split(key, 5)

    N, Cin, Cout, H, W = 2, 4, 8, 16, 16
    x = jax.random.normal(k_x, (N, Cin, H, W), jnp.float32)
    dw_w = (1.0 / 3.0) * jax.random.normal(k1, (Cin, 3, 3), jnp.float32)
    dw_b = (1.0 / 3.0) * jax.random.normal(k2, (Cin,), jnp.float32)
    pw_w = (Cin ** -0.5) * jax.random.normal(k3, (Cout, Cin), jnp.float32)
    pw_b = (Cin ** -0.5) * jax.random.normal(k4, (Cout,), jnp.float32)

    fwd = jax.jit(depthwise_conv)
    out = jax.block_until_ready(fwd(x, dw_w, dw_b, pw_w, pw_b))
    assert out.shape == (N, Cout, H, W), out.shape

    ref = _reference(x, dw_w, dw_b, pw_w, pw_b)
    err = float(jnp.max(jnp.abs(out - ref)))
    if err > 5e-2:   # loose tol: MXU default-precision f32 matmul
        raise AssertionError(f"kernel mismatch vs reference: max abs err = {err}")
    print("KERNEL_OK")
</pallas_src>

<mosaic_0001>
module attributes {stable_mosaic.version = 11 : i64} {
  func.func @_dwsep_kernel(%arg0: i32, %arg1: memref<1x4x256xf32, #tpu.memory_space<vmem>>, %arg2: memref<8x36xf32, #tpu.memory_space<vmem>>, %arg3: memref<8x1xf32, #tpu.memory_space<vmem>>, %arg4: memref<36x256xf32, #tpu.memory_space<vmem>>, %arg5: memref<1x8x256xf32, #tpu.memory_space<vmem>>, %arg6: memref<4x290xf32, #tpu.memory_space<vmem>>, %arg7: memref<36x256xf32, #tpu.memory_space<vmem>>) attributes {dimension_semantics = [#tpu.dimension_semantics<parallel>], iteration_bounds = array<i64: 2>, scalar_prefetch = 0 : i64, scratch_operands = 2 : i64, tpu.core_type = #tpu.core_type<tc>, window_params = [{transform_indices = @transform_0, window_bounds = array<i64: 1, 4, 256>}, {pipeline_mode = #tpu.pipeline_mode<synchronous>, transform_indices = @transform_1, window_bounds = array<i64: 8, 36>}, {pipeline_mode = #tpu.pipeline_mode<synchronous>, transform_indices = @transform_2, window_bounds = array<i64: 8, 1>}, {pipeline_mode = #tpu.pipeline_mode<synchronous>, transform_indices = @transform_3, window_bounds = array<i64: 36, 256>}, {transform_indices = @transform_4, window_bounds = array<i64: 1, 8, 256>}]} {
    %cst = arith.constant 0.000000e+00 : f32
    %0 = vector.broadcast %cst : f32 to vector<4x290xf32>
    %c0 = arith.constant 0 : index
    %c0_0 = arith.constant 0 : index
    %1 = vector.load %arg6[%c0, %c0_0] : memref<4x290xf32, #tpu.memory_space<vmem>>, vector<4x290xf32>
    tpu.vector_store %arg6[%c0, %c0_0], %0 {strides = array<i32>} : memref<4x290xf32, #tpu.memory_space<vmem>>, vector<4x290xf32>,
    %c0_1 = arith.constant 0 : index
    %c0_2 = arith.constant 0 : index
    %c0_3 = arith.constant 0 : index
    %2 = vector.load %arg1[%c0_1, %c0_2, %c0_3] : memref<1x4x256xf32, #tpu.memory_space<vmem>>, vector<1x4x256xf32>
    %3 = vector.shape_cast %2 : vector<1x4x256xf32> to vector<4x256xf32>
    %c0_4 = arith.constant 0 : index
    %c17 = arith.constant 17 : index
    %4 = vector.load %arg6[%c0_4, %c17] : memref<4x290xf32, #tpu.memory_space<vmem>>, vector<4x256xf32>
    tpu.vector_store %arg6[%c0_4, %c17], %3 {strides = array<i32>} : memref<4x290xf32, #tpu.memory_space<vmem>>, vector<4x256xf32>,
    %c0_5 = arith.constant 0 : index
    %c0_6 = arith.constant 0 : index
    %5 = vector.load %arg6[%c0_5, %c0_6] : memref<4x290xf32, #tpu.memory_space<vmem>>, vector<4x256xf32>
    %c0_7 = arith.constant 0 : index
    %c0_8 = arith.constant 0 : index
    %6 = vector.load %arg7[%c0_7, %c0_8] : memref<36x256xf32, #tpu.memory_space<vmem>>, vector<4x256xf32>
    tpu.vector_store %arg7[%c0_7, %c0_8], %5 {strides = array<i32>} : memref<36x256xf32, #tpu.memory_space<vmem>>, vector<4x256xf32>,
    %c0_9 = arith.constant 0 : index
    %c1 = arith.constant 1 : index
    %7 = vector.load %arg6[%c0_9, %c1] : memref<4x290xf32, #tpu.memory_space<vmem>>, vector<4x256xf32>
    %c4 = arith.constant 4 : index
    %c0_10 = arith.constant 0 : index
    %8 = vector.load %arg7[%c4, %c0_10] : memref<36x256xf32, #tpu.memory_space<vmem>>, vector<4x256xf32>
    tpu.vector_store %arg7[%c4, %c0_10], %7 {strides = array<i32>} : memref<36x256xf32, #tpu.memory_space<vmem>>, vector<4x256xf32>,
    %c0_11 = arith.constant 0 : index
    %c2 = arith.constant 2 : index
    %9 = vector.load %arg6[%c0_11, %c2] : memref<4x290xf32, #tpu.memory_space<vmem>>, vector<4x256xf32>
    %c8 = arith.constant 8 : index
    %c0_12 = arith.constant 0 : index
    %10 = vector.load %arg7[%c8, %c0_12] : memref<36x256xf32, #tpu.memory_space<vmem>>, vector<4x256xf32>
    tpu.vector_store %arg7[%c8, %c0_12], %9 {strides = array<i32>} : memref<36x256xf32, #tpu.memory_space<vmem>>, vector<4x256xf32>,
    %c0_13 = arith.constant 0 : index
    %c16 = arith.constant 16 : index
    %11 = vector.load %arg6[%c0_13, %c16] : memref<4x290xf32, #tpu.memory_space<vmem>>, vector<4x256xf32>
    %c12 = arith.constant 12 : index
    %c0_14 = arith.constant 0 : index
    %12 = vector.load %arg7[%c12, %c0_14] : memref<36x256xf32, #tpu.memory_space<vmem>>, vector<4x256xf32>
    tpu.vector_store %arg7[%c12, %c0_14], %11 {strides = array<i32>} : memref<36x256xf32, #tpu.memory_space<vmem>>, vector<4x256xf32>,
    %c0_15 = arith.constant 0 : index
    %c17_16 = arith.constant 17 : index
    %13 = vector.load %arg6[%c0_15, %c17_16] : memref<4x290xf32, #tpu.memory_space<vmem>>, vector<4x256xf32>
    %c16_17 = arith.constant 16 : index
    %c0_18 = arith.constant 0 : index
    %14 = vector.load %arg7[%c16_17, %c0_18] : memref<36x256xf32, #tpu.memory_space<vmem>>, vector<4x256xf32>
    tpu.vector_store %arg7[%c16_17, %c0_18], %13 {strides = array<i32>} : memref<36x256xf32, #tpu.memory_space<vmem>>, vector<4x256xf32>,
    %c0_19 = arith.constant 0 : index
    %c18 = arith.constant 18 : index
    %15 = vector.load %arg6[%c0_19, %c18] : memref<4x290xf32, #tpu.memory_space<vmem>>, vector<4x256xf32>
    %c20 = arith.constant 20 : index
    %c0_20 = arith.constant 0 : index
    %16 = vector.load %arg7[%c20, %c0_20] : memref<36x256xf32, #tpu.memory_space<vmem>>, vector<4x256xf32>
    tpu.vector_store %arg7[%c20, %c0_20], %15 {strides = array<i32>} : memref<36x256xf32, #tpu.memory_space<vmem>>, vector<4x256xf32>,
    %c0_21 = arith.constant 0 : index
    %c32 = arith.constant 32 : index
    %17 = vector.load %arg6[%c0_21, %c32] : memref<4x290xf32, #tpu.memory_space<vmem>>, vector<4x256xf32>
    %c24 = arith.constant 24 : index
    %c0_22 = arith.constant 0 : index
    %18 = vector.load %arg7[%c24, %c0_22] : memref<36x256xf32, #tpu.memory_space<vmem>>, vector<4x256xf32>
    tpu.vector_store %arg7[%c24, %c0_22], %17 {strides = array<i32>} : memref<36x256xf32, #tpu.memory_space<vmem>>, vector<4x256xf32>,
    %c0_23 = arith.constant 0 : index
    %c33 = arith.constant 33 : index
    %19 = vector.load %arg6[%c0_23, %c33] : memref<4x290xf32, #tpu.memory_space<vmem>>, vector<4x256xf32>
    %c28 = arith.constant 28 : index
    %c0_24 = arith.constant 0 : index
    %20 = vector.load %arg7[%c28, %c0_24] : memref<36x256xf32, #tpu.memory_space<vmem>>, vector<4x256xf32>
    tpu.vector_store %arg7[%c28, %c0_24], %19 {strides = array<i32>} : memref<36x256xf32, #tpu.memory_space<vmem>>, vector<4x256xf32>,
    %c0_25 = arith.constant 0 : index
    %c34 = arith.constant 34 : index
    %21 = vector.load %arg6[%c0_25, %c34] : memref<4x290xf32, #tpu.memory_space<vmem>>, vector<4x256xf32>
    %c32_26 = arith.constant 32 : index
    %c0_27 = arith.constant 0 : index
    %22 = vector.load %arg7[%c32_26, %c0_27] : memref<36x256xf32, #tpu.memory_space<vmem>>, vector<4x256xf32>
    tpu.vector_store %arg7[%c32_26, %c0_27], %21 {strides = array<i32>} : memref<36x256xf32, #tpu.memory_space<vmem>>, vector<4x256xf32>,
    %c0_28 = arith.constant 0 : index
    %c0_29 = arith.constant 0 : index
    %23 = vector.load %arg7[%c0_28, %c0_29] : memref<36x256xf32, #tpu.memory_space<vmem>>, vector<36x256xf32>
    %c0_30 = arith.constant 0 : index
    %c0_31 = arith.constant 0 : index
    %24 = vector.load %arg4[%c0_30, %c0_31] : memref<36x256xf32, #tpu.memory_space<vmem>>, vector<36x256xf32>
    %25 = arith.mulf %23, %24 : vector<36x256xf32>
    %c0_32 = arith.constant 0 : index
    %c0_33 = arith.constant 0 : index
    %26 = vector.load %arg2[%c0_32, %c0_33] : memref<8x36xf32, #tpu.memory_space<vmem>>, vector<8x36xf32>
    %cst_34 = arith.constant dense<0.000000e+00> : vector<8x256xf32>
    %27 = tpu.matmul %26, %25, %cst_34 {dimension_numbers = #tpu.dot_dimension_numbers<[1], [0], [0], [1], [0, 0, 1, 1], [], []>} : vector<8x36xf32>, vector<36x256xf32>, vector<8x256xf32> -> vector<8x256xf32>
    %c0_35 = arith.constant 0 : index
    %c0_36 = arith.constant 0 : index
    %28 = vector.load %arg3[%c0_35, %c0_36] : memref<8x1xf32, #tpu.memory_space<vmem>>, vector<8x1xf32>
    %29 = vector.broadcast %28 : vector<8x1xf32> to vector<8x256xf32>
    %30 = arith.addf %27, %29 : vector<8x256xf32>
    %cst_37 = arith.constant 0.000000e+00 : f32
    %31 = vector.broadcast %cst_37 : f32 to vector<8x256xf32>
    %32 = arith.cmpf oge, %30, %31 : vector<8x256xf32>
    %cst_38 = arith.constant 2.000000e-01 : f32
    %33 = vector.broadcast %cst_38 : f32 to vector<8x256xf32>
    %34 = arith.mulf %33, %30 : vector<8x256xf32>
    %35 = arith.select %32, %30, %34 : vector<8x256xi1>, vector<8x256xf32>
    %c0_39 = arith.constant 0 : index
    %c0_40 = arith.constant 0 : index
    %c0_41 = arith.constant 0 : index
    %36 = vector.load %arg5[%c0_39, %c0_40, %c0_41] : memref<1x8x256xf32, #tpu.memory_space<vmem>>, vector<1x8x256xf32>
    %37 = vector.shape_cast %36 : vector<1x8x256xf32> to vector<8x256xf32>
    %38 = vector.shape_cast %35 : vector<8x256xf32> to vector<1x8x256xf32>
    tpu.vector_store %arg5[%c0_39, %c0_40, %c0_41], %38 {strides = array<i32>} : memref<1x8x256xf32, #tpu.memory_space<vmem>>, vector<1x8x256xf32>,
    return
  }
  func.func @transform_0(%arg0: i32) -> (i32, i32, i32) {
    %c0_i32 = arith.constant 0 : i32
    %c0_i32_0 = arith.constant 0 : i32
    %c0_i32_1 = arith.constant 0 : i32
    return %arg0, %c0_i32, %c0_i32_0 : i32, i32, i32
  }
  func.func @transform_1(%arg0: i32) -> (i32, i32) {
    %c0_i32 = arith.constant 0 : i32
    %c0_i32_0 = arith.constant 0 : i32
    %c0_i32_1 = arith.constant 0 : i32
    return %c0_i32, %c0_i32_0 : i32, i32
  }
  func.func @transform_2(%arg0: i32) -> (i32, i32) {
    %c0_i32 = arith.constant 0 : i32
    %c0_i32_0 = arith.constant 0 : i32
    %c0_i32_1 = arith.constant 0 : i32
    return %c0_i32, %c0_i32_0 : i32, i32
  }
  func.func @transform_3(%arg0: i32) -> (i32, i32) {
    %c0_i32 = arith.constant 0 : i32
    %c0_i32_0 = arith.constant 0 : i32
    %c0_i32_1 = arith.constant 0 : i32
    return %c0_i32, %c0_i32_0 : i32, i32
  }
  func.func @transform_4(%arg0: i32) -> (i32, i32, i32) {
    %c0_i32 = arith.constant 0 : i32
    %c0_i32_0 = arith.constant 0 : i32
    %c0_i32_1 = arith.constant 0 : i32
    return %arg0, %c0_i32, %c0_i32_0 : i32, i32, i32
  }
}

</mosaic_0001>

<llo_original>
// kernel: depthwise_conv.1
$region0: #{depthwise_conv.1}
  #allocation0 [shape = 'u32[]', space=smem, size = 0x4, offset = 0x4, fixed_abs, tag = 'smem constant byte address 0x4 - core index']
  #allocation1 [shape = 'u32[144,128]{1,0:T(1,128)}', space=vmem, size = 0x12000, scoped, tag = 'internal scratch']
  #allocation2 [shape = 'f32[4,290]{1,0:T(4,128)}', space=vmem, size = 0x1800, scoped, tag = 'scratch operand']
  #allocation3 [shape = 'f32[36,256]{1,0:T(8,128)}', space=vmem, size = 0xa000, scoped, tag = 'scratch operand']
  %s0 = inlined_call_operand.vmem [shape: f32[2,4,256], index: 0, kind: input, shape index: {}]
  %s1 = inlined_call_operand.vmem [shape: f32[8,36], index: 1, kind: input, shape index: {}]
  %s2 = inlined_call_operand.vmem [shape: f32[8,1], index: 2, kind: input, shape index: {}]
  %s3 = inlined_call_operand.vmem [shape: f32[36,256], index: 3, kind: input, shape index: {}]
  %s4 = inlined_call_operand.vmem [shape: f32[2,8,256], index: 4, kind: output, shape index: {}]
  %s5 = sld [smem:[#allocation0]]
  $region49: #{depthwise_conv.1} parent=0
    _
  %s7 = ssub.s32 1, %s5
  %s8 = scalar_select 0, %s7, %s5
  loop: start=0, step=1, limit=4
  $region2: #{depthwise_conv.1} parent=0 // loop_pre_header
    _
  $region3: #{depthwise_conv.1} parent=0 // loop_header
    %s10 = sphi 0, %s14
    %p11 = scmp.ge.s32.totalorder %s10, 4
    %s20 = sphi 0, %s22
    %s23 = sphi 0, %s20
    %s24 = sphi 0, %s23
    %s40 = sphi 0, %s24
    %s44 = sphi 0, %s44
    %s46 = sphi 0, %s44
    %s47 = sphi 0, %s46
    %s61 = sphi 0, %s47
    %s65 = sphi 0, %s65
    %s67 = sphi 0, %s65
    %s68 = sphi 0, %s67
    %s82 = sphi 0, %s68
    %s86 = sphi 0, %s86
    %s88 = sphi 0, %s86
    %s89 = sphi 0, %s88
    %s103 = sphi 0, %s89
    %s109 = sphi 0, %s111
    %s112 = sphi 0, %s109
    %s113 = sphi 0, %s112
    %s129 = sphi 0, %s113
  $region4: #{depthwise_conv.1} parent=0 // loop_header_branch
    %13 = sbr.rel (%p11) target = $region8
  $region5: #{depthwise_conv.1} parent=0 // loop_body
    %s15 = ssub.s32 %s10, 1
    %s16 = ssub.s32 %s10, 2
    %s17 = sadd.s32 %s10, 1
    %s18 = ssub.s32 %s10, %s17
    %p19 = scmp.eq.s32.totalorder %s18, 0
    %s21 = sadd.s32 %s20, 1
    %s22 = scalar_select %p19, %s20, %s21
    %p25 = pneg %p19
    %p26 = scmp.eq.s32.totalorder %s10, 1
    %p27 = por %p25, %p26
    %p28 = scmp.ne.s32.totalorder %s20, %s23
    %p29 = scmp.eq.s32.totalorder %s10, 0
    %p30 = por %p28, %p29
    %p31 = scmp.ne.s32.totalorder %s20, %s23
    %p32 = scmp.eq.s32.totalorder %s15, 1
    %p33 = por %p31, %p32
    %p34 = scmp.ne.s32.totalorder %s23, %s24
    %p35 = scmp.eq.s32.totalorder %s15, 0
    %p36 = por %p34, %p35
    %p37 = scmp.ne.s32.totalorder %s23, %s24
    %p38 = scmp.eq.s32.totalorder %s16, 1
    %p39 = por %p37, %p38
    %p41 = scmp.ne.s32.totalorder %s24, %s40
    %p42 = scmp.eq.s32.totalorder %s16, 0
    %p43 = por %p41, %p42
    %s45 = sadd.s32 %s44, 1
    %p48 = scmp.eq.s32.totalorder %s10, 1
    %p49 = scmp.ne.s32.totalorder %s44, %s46
    %p50 = scmp.eq.s32.totalorder %s10, 0
    %p51 = por %p49, %p50
    %p52 = scmp.ne.s32.totalorder %s44, %s46
    %p53 = scmp.eq.s32.totalorder %s15, 1
    %p54 = por %p52, %p53
    %p55 = scmp.ne.s32.totalorder %s46, %s47
    %p56 = scmp.eq.s32.totalorder %s15, 0
    %p57 = por %p55, %p56
    %p58 = scmp.ne.s32.totalorder %s46, %s47
    %p59 = scmp.eq.s32.totalorder %s16, 1
    %p60 = por %p58, %p59
    %p62 = scmp.ne.s32.totalorder %s47, %s61
    %p63 = scmp.eq.s32.totalorder %s16, 0
    %p64 = por %p62, %p63
    %s66 = sadd.s32 %s65, 1
    %p69 = scmp.eq.s32.totalorder %s10, 1
    %p70 = scmp.ne.s32.totalorder %s65, %s67
    %p71 = scmp.eq.s32.totalorder %s10, 0
    %p72 = por %p70, %p71
    %p73 = scmp.ne.s32.totalorder %s65, %s67
    %p74 = scmp.eq.s32.totalorder %s15, 1
    %p75 = por %p73, %p74
    %p76 = scmp.ne.s32.totalorder %s67, %s68
    %p77 = scmp.eq.s32.totalorder %s15, 0
    %p78 = por %p76, %p77
    %p79 = scmp.ne.s32.totalorder %s67, %s68
    %p80 = scmp.eq.s32.totalorder %s16, 1
    %p81 = por %p79, %p80
    %p83 = scmp.ne.s32.totalorder %s68, %s82
    %p84 = scmp.eq.s32.totalorder %s16, 0
    %p85 = por %p83, %p84
    %s87 = sadd.s32 %s86, 1
    %p90 = scmp.eq.s32.totalorder %s10, 1
    %p91 = scmp.ne.s32.totalorder %s86, %s88
    %p92 = scmp.eq.s32.totalorder %s10, 0
    %p93 = por %p91, %p92
    %p94 = scmp.ne.s32.totalorder %s86, %s88
    %p95 = scmp.eq.s32.totalorder %s15, 1
    %p96 = por %p94, %p95
    %p97 = scmp.ne.s32.totalorder %s88, %s89
    %p98 = scmp.eq.s32.totalorder %s15, 0
    %p99 = por %p97, %p98
    %p100 = scmp.ne.s32.totalorder %s88, %s89
    %p101 = scmp.eq.s32.totalorder %s16, 1
    %p102 = por %p100, %p101
    %p104 = scmp.ne.s32.totalorder %s89, %s103
    %p105 = scmp.eq.s32.totalorder %s16, 0
    %p106 = por %p104, %p105
    %s107 = ssub.s32 %s10, %s17
    %p108 = scmp.eq.s32.totalorder %s107, 0
    %s110 = sadd.s32 %s109, 1
    %s111 = scalar_select %p108, %s109, %s110
    %p114 = pneg %p108
    %p115 = scmp.eq.s32.totalorder %s10, 1
    %p116 = por %p114, %p115
    %p117 = scmp.ne.s32.totalorder %s109, %s112
    %p118 = scmp.eq.s32.totalorder %s10, 0
    %p119 = por %p117, %p118
    %p120 = scmp.ne.s32.totalorder %s109, %s112
    %p121 = scmp.eq.s32.totalorder %s15, 1
    %p122 = por %p120, %p121
    %p123 = scmp.ne.s32.totalorder %s112, %s113
    %p124 = scmp.eq.s32.totalorder %s15, 0
    %p125 = por %p123, %p124
    %p126 = scmp.ne.s32.totalorder %s112, %s113
    %p127 = scmp.eq.s32.totalorder %s16, 1
    %p128 = por %p126, %p127
    %p130 = scmp.ne.s32.totalorder %s113, %s129
    %p131 = scmp.eq.s32.totalorder %s16, 0
    %p132 = por %p130, %p131
    %p133 = scmp.le.s32.totalorder 1, %s10
    %p134 = scmp.lt.s32.totalorder %s10, 3
    %p135 = pnand %p133, %p134
    %p136 = pneg %p135
    // Predicated region
    $region9: #{depthwise_conv.1} parent=5 // pred_check
      _
    $region10: #{depthwise_conv.1} parent=5 // pred_check_branch
      %138 = sbr.rel (%p135) target = $region12
    $region11: #{depthwise_conv.1} parent=5 // pred_region
      %s139 = ssub.s32 %s10, 1
      // Predicated region
      $region13: #{depthwise_conv.1} parent=11 // pred_check
        %p140 = pneg %p57
      $region14: #{depthwise_conv.1} parent=11 // pred_check_branch
        %142 = sbr.rel (%p140) target = $region16
      $region15: #{depthwise_conv.1} parent=11 // pred_region
        _
      $region16: #{depthwise_conv.1} parent=11 // pred_fallthru
        _
      // Predicated region
      $region17: #{depthwise_conv.1} parent=11 // pred_check
        %p143 = pneg %p78
      $region18: #{depthwise_conv.1} parent=11 // pred_check_branch
        %145 = sbr.rel (%p143) target = $region20
      $region19: #{depthwise_conv.1} parent=11 // pred_region
        _
      $region20: #{depthwise_conv.1} parent=11 // pred_fallthru
        _
      // Predicated region
      $region21: #{depthwise_conv.1} parent=11 // pred_check
        %p146 = pneg %p99
      $region22: #{depthwise_conv.1} parent=11 // pred_check_branch
        %148 = sbr.rel (%p146) target = $region24
      $region23: #{depthwise_conv.1} parent=11 // pred_region
        _
      $region24: #{depthwise_conv.1} parent=11 // pred_fallthru
        _
    $region12: #{depthwise_conv.1} parent=5 // pred_fallthru
      _
    %p149 = scmp.lt.s32.totalorder %s10, 2
    // Predicated region
    $region25: #{depthwise_conv.1} parent=5 // pred_check
      %p150 = pneg %p149
    $region26: #{depthwise_conv.1} parent=5 // pred_check_branch
      %152 = sbr.rel (%p150) target = $region28
    $region27: #{depthwise_conv.1} parent=5 // pred_region
      // Predicated region
      $region29: #{depthwise_conv.1} parent=27 // pred_check
        %p153 = pneg %p30
      $region30: #{depthwise_conv.1} parent=27 // pred_check_branch
        %155 = sbr.rel (%p153) target = $region32
      $region31: #{depthwise_conv.1} parent=27 // pred_region
        %p156 = scmp.lt.s32.totalorder %s10, 1
        %s157 = scalar_select %p156, %s10, 1
        %s158 = smul.addr %s157, 2
        %s159 = smul.addr %s158, 4
        %s160 = scalar_lea.vmem %s0, %s159
      $region32: #{depthwise_conv.1} parent=27 // pred_fallthru
        _
    $region28: #{depthwise_conv.1} parent=5 // pred_fallthru
      _
    %p161 = scmp.le.s32.totalorder 1, %s10
    %p162 = scmp.lt.s32.totalorder %s10, 3
    %p163 = pnand %p161, %p162
    %p164 = pneg %p163
    // Predicated region
    $region33: #{depthwise_conv.1} parent=5 // pred_check
      _
    $region34: #{depthwise_conv.1} parent=5 // pred_check_branch
      %166 = sbr.rel (%p163) target = $region36
    $region35: #{depthwise_conv.1} parent=5 // pred_region
      %s167 = ssub.s32 %s10, 1
      %p168 = scmp.lt.s32.totalorder %s15, 1
      %s169 = scalar_select %p168, %s15, 1
      %s170 = smul.addr %s169, 2
      %s171 = smul.addr %s170, 4
      %s172 = scalar_lea.vmem %s0, %s171
      %p173 = pneg %p36
      %p174 = pneg %p33
      %p175 = pneg %p57
      %p176 = pneg %p54
      %p177 = pneg %p78
      %p178 = pneg %p75
      %p179 = pneg %p99
      %p180 = pneg %p96
      %p181 = pneg %p125
      %p182 = pneg %p122
      %p183 = scmp.lt.s32.totalorder %s15, 1
      %s184 = scalar_select %p183, %s15, 1
      %s185 = smul.addr %s184, 2
      %s186 = smul.addr %s185, 8
      %s187 = scalar_lea.vmem %s4, %s186
      %p188 = scmp.lt.s32.totalorder %s15, 1
      %s189 = scalar_select %p188, %s15, 1
      %s190 = smul.addr %s189, 2
      %s191 = smul.addr %s190, 4
      %s192 = scalar_lea.vmem %s0, %s191
      %p193 = scmp.lt.s32.totalorder %s15, 1
      %s194 = scalar_select %p193, %s15, 1
      %s195 = smul.addr %s194, 2
      %s196 = smul.addr %s195, 8
      %s197 = scalar_lea.vmem %s4, %s196
      %198 = vst [vmem:[#allocation2] sm:$0xff] 0.0
      %vm199 = vcmask 273408
      %200 = vst.msk [vmem:[#allocation2 + $0x8] sm:$0xf] %vm199, 0.0
      %v201 = vld [vmem:[%s192] sm:$0xff]
      %203 = vrot.lane.b32.xlu0 %v201, 17
      %v204 = vpop.permute.xlu0 %203
      %v205 = vrot.slane %v204, 4
      %vm206 = vcmask 138240
      %v207 = vsel %vm206, %v205, %v204
      %vm210 = vcmask 1043592
      %vm211 = vcmask 1047556
      %vm212 = vmor %vm211, %vm210
      %213 = vst.msk [vmem:[#allocation2] sm:$0xff] %vm212, %v207
      %vm214 = vcmask 134144
      %215 = vst.msk [vmem:[#allocation2 + $0x8] sm:$0xf] %vm214, %v205
      %v216 = vld [vmem:[#allocation2] sm:$0xff]
      %v218 = vcombine.high %v216, %v216
      %220 = vst [vmem:[#allocation3] sm:$0xf] %v216
      %221 = vst [vmem:[#allocation3 + $0x8] sm:$0xf] %v218
      %v222 = vld [vmem:[#allocation2] sm:$0xff]
      %v223 = vld [vmem:[#allocation2 + $0x8] sm:$0xf]
      %v226 = vcombine.low %v222, %v222
      %v227 = vcombine.low %v223, %v223
      %228 = vrot.lane.b32.xlu0 %v226, 127
      %v229 = vpop.permute.xlu0 %228
      %230 = vrot.lane.b32.xlu0 %v222, 127
      %v231 = vpop.permute.xlu0 %230
      %232 = vrot.lane.b32.xlu0 %v227, 127
      %v233 = vpop.permute.xlu0 %232
      %vm234 = vcmask 1039360
      %v235 = vsel %vm234, %v229, %v231
      %v236 = vsel %vm234, %v231, %v233
      %239 = vst [vmem:[#allocation3] sm:$0xf0] %v235
      %240 = vst [vmem:[#allocation3 + $0x8] sm:$0xf0] %v236
      %v241 = vld [vmem:[#allocation2] sm:$0xff]
      %v242 = vld [vmem:[#allocation2 + $0x8] sm:$0xf]
      %v245 = vcombine.high %v241, %v241
      %246 = vrot.lane.b32.xlu0 %v241, 126
      %v247 = vpop.permute.xlu0 %246
      %248 = vrot.lane.b32.xlu0 %v245, 126
      %v249 = vpop.permute.xlu0 %248
      %250 = vrot.lane.b32.xlu0 %v242, 126
      %v251 = vpop.permute.xlu0 %250
      %vm252 = vcmask 1031168
      %v253 = vsel %vm252, %v247, %v249
      %v254 = vsel %vm252, %v249, %v251
      %257 = vst [vmem:[#allocation3 + $0x10] sm:$0xf] %v253
      %258 = vst [vmem:[#allocation3 + $0x18] sm:$0xf] %v254
      %v259 = vld [vmem:[#allocation2] sm:$0xff]
      %v260 = vld [vmem:[#allocation2 + $0x8] sm:$0xf]
      %v263 = vcombine.low %v259, %v259
      %v264 = vcombine.low %v260, %v260
      %265 = vrot.lane.b32.xlu0 %v263, 112
      %v266 = vpop.permute.xlu0 %265
      %267 = vrot.lane.b32.xlu0 %v259, 112
      %v268 = vpop.permute.xlu0 %267
      %269 = vrot.lane.b32.xlu0 %v264, 112
      %v270 = vpop.permute.xlu0 %269
      %vm271 = vcmask 916480
      %v272 = vsel %vm271, %v266, %v268
      %v273 = vsel %vm271, %v268, %v270
      %276 = vst [vmem:[#allocation3 + $0x10] sm:$0xf0] %v272
      %277 = vst [vmem:[#allocation3 + $0x18] sm:$0xf0] %v273
      %v278 = vld [vmem:[#allocation2] sm:$0xff]
      %v279 = vld [vmem:[#allocation2 + $0x8] sm:$0xf]
      %v282 = vcombine.high %v278, %v278
      %283 = vrot.lane.b32.xlu0 %v278, 111
      %v284 = vpop.permute.xlu0 %283
      %285 = vrot.lane.b32.xlu0 %v282, 111
      %v286 = vpop.permute.xlu0 %285
      %287 = vrot.lane.b32.xlu0 %v279, 111
      %v288 = vpop.permute.xlu0 %287
      %vm289 = vcmask 908288
      %v290 = vsel %vm289, %v284, %v286
      %v291 = vsel %vm289, %v286, %v288
      %294 = vst [vmem:[#allocation3 + $0x20] sm:$0xf] %v290
      %295 = vst [vmem:[#allocation3 + $0x28] sm:$0xf] %v291
      %v296 = vld [vmem:[#allocation2] sm:$0xff]
      %v297 = vld [vmem:[#allocation2 + $0x8] sm:$0xf]
      %v300 = vcombine.low %v296, %v296
      %v301 = vcombine.low %v297, %v297
      %302 = vrot.lane.b32.xlu0 %v300, 110
      %v303 = vpop.permute.xlu0 %302
      %304 = vrot.lane.b32.xlu0 %v296, 110
      %v305 = vpop.permute.xlu0 %304
      %306 = vrot.lane.b32.xlu0 %v301, 110
      %v307 = vpop.permute.xlu0 %306
      %vm308 = vcmask 900096
      %v309 = vsel %vm308, %v303, %v305
      %v310 = vsel %vm308, %v305, %v307
      %313 = vst [vmem:[#allocation3 + $0x20] sm:$0xf0] %v309
      %314 = vst [vmem:[#allocation3 + $0x28] sm:$0xf0] %v310
      %v315 = vld [vmem:[#allocation2] sm:$0xff]
      %v316 = vld [vmem:[#allocation2 + $0x8] sm:$0xf]
      %v319 = vcombine.high %v315, %v315
      %320 = vrot.lane.b32.xlu0 %v315, 96
      %v321 = vpop.permute.xlu0 %320
      %322 = vrot.lane.b32.xlu0 %v319, 96
      %v323 = vpop.permute.xlu0 %322
      %324 = vrot.lane.b32.xlu0 %v316, 96
      %v325 = vpop.permute.xlu0 %324
      %vm326 = vcmask 785408
      %v327 = vsel %vm326, %v321, %v323
      %v328 = vsel %vm326, %v323, %v325
      %331 = vst [vmem:[#allocation3 + $0x30] sm:$0xf] %v327
      %332 = vst [vmem:[#allocation3 + $0x38] sm:$0xf] %v328
      %v333 = vld [vmem:[#allocation2] sm:$0xff]
      %v334 = vld [vmem:[#allocation2 + $0x8] sm:$0xf]
      %v337 = vcombine.low %v333, %v333
      %v338 = vcombine.low %v334, %v334
      %339 = vrot.lane.b32.xlu0 %v337, 95
      %v340 = vpop.permute.xlu0 %339
      %341 = vrot.lane.b32.xlu0 %v333, 95
      %v342 = vpop.permute.xlu0 %341
      %343 = vrot.lane.b32.xlu0 %v338, 95
      %v344 = vpop.permute.xlu0 %343
      %vm345 = vcmask 777216
      %v346 = vsel %vm345, %v340, %v342
      %v347 = vsel %vm345, %v342, %v344
      %350 = vst [vmem:[#allocation3 + $0x30] sm:$0xf0] %v346
      %351 = vst [vmem:[#allocation3 + $0x38] sm:$0xf0] %v347
      %v352 = vld [vmem:[#allocation2] sm:$0xff]
      %v353 = vld [vmem:[#allocation2 + $0x8] sm:$0xf]
      %v356 = vcombine.high %v352, %v352
      %357 = vrot.lane.b32.xlu0 %v352, 94
      %v358 = vpop.permute.xlu0 %357
      %359 = vrot.lane.b32.xlu0 %v356, 94
      %v360 = vpop.permute.xlu0 %359
      %361 = vrot.lane.b32.xlu0 %v353, 94
      %v362 = vpop.permute.xlu0 %361
      %vm363 = vcmask 769024
      %v364 = vsel %vm363, %v358, %v360
      %v365 = vsel %vm363, %v360, %v362
      %368 = vst [vmem:[#allocation3 + $0x40] sm:$0xf] %v364
      %369 = vst [vmem:[#allocation3 + $0x48] sm:$0xf] %v365
      %v370 = vld [vmem:[#allocation3] sm:$0xff]
      %v371 = vld [vmem:[#allocation3 + $0x8] sm:$0xff]
      %v372 = vld [vmem:[#allocation3 + $0x10] sm:$0xff]
      %v373 = vld [vmem:[#allocation3 + $0x18] sm:$0xff]
      %v374 = vld [vmem:[#allocation3 + $0x20] sm:$0xff]
      %v375 = vld [vmem:[#allocation3 + $0x28] sm:$0xff]
      %v376 = vld [vmem:[#allocation3 + $0x30] sm:$0xff]
      %v377 = vld [vmem:[#allocation3 + $0x38] sm:$0xff]
      %v378 = vld [vmem:[#allocation3 + $0x40] sm:$0xf]
      %v379 = vld [vmem:[#allocation3 + $0x48] sm:$0xf]
      %v380 = vld [vmem:[%s3] sm:$0xff]
      %v381 = vld [vmem:[%s3 + $0x8] sm:$0xff]
      %v382 = vld [vmem:[%s3 + $0x10] sm:$0xff]
      %v383 = vld [vmem:[%s3 + $0x18] sm:$0xff]
      %v384 = vld [vmem:[%s3 + $0x20] sm:$0xff]
      %v385 = vld [vmem:[%s3 + $0x28] sm:$0xff]
      %v386 = vld [vmem:[%s3 + $0x30] sm:$0xff]
      %v387 = vld [vmem:[%s3 + $0x38] sm:$0xff]
      %v388 = vld [vmem:[%s3 + $0x40] sm:$0xf]
      %v389 = vld [vmem:[%s3 + $0x48] sm:$0xf]
      %v390 = vmul.f32 %v370, %v380
      %v391 = vmul.f32 %v371, %v381
      %v392 = vmul.f32 %v372, %v382
      %v393 = vmul.f32 %v373, %v383
      %v394 = vmul.f32 %v374, %v384
      %v395 = vmul.f32 %v375, %v385
      %v396 = vmul.f32 %v376, %v386
      %v397 = vmul.f32 %v377, %v387
      %v398 = vmul.f32 %v378, %v388
      %v399 = vmul.f32 %v379, %v389
      %v400 = vld [vmem:[%s1] sm:$0xff]
      %v401 = vld [vmem:[%s2] sm:$0xff]
      %403 = vset.pattern.permute.xlu0 0
      %404 = vperm.xlu0 %403, %v401
      %v405 = vpop.permute.xlu0 %404
      %vm407 = vcmask 293888
      %v409 = vsel %vm407, %v400, 0
      %vm411 = vcmask 1043456
      %v413 = vsel %vm411, %v398, 0
      %v416 = vsel %vm411, %v399, 0
      %418 = vmatprep.subr.mxu0 %v391
      %419 = vmatpush1.msra.mxu0 %v390
      %420 = vmatprep.subr.mxu0 %v393
      %421 = vmatpush1.msra.mxu0 %v392
      %422 = vmatprep.subr.mxu0 %v395
      %423 = vmatpush1.msra.mxu0 %v394
      %424 = vmatprep.subr.mxu0 %v397
      %425 = vmatpush1.msra.mxu0 %v396
      %426 = vmatprep.subr.mxu0 %v416
      %427 = vmatpush1.msra.mxu0 %v413
      %428 = vmatprep.subr.mxu0 0.0
      %429 = vmatpush1.msra.mxu0 0.0
      %430 = vmatprep.subr.mxu0 0.0
      %431 = vmatpush1.msra.mxu0 0.0
      %432 = vmatprep.subr.mxu0 0.0
      %433 = vmatpush1.msra.mxu0 0.0
      %434 = vmatprep.subr.mxu0 0.0
      %435 = vmatpush1.msra.mxu0 0.0
      %436 = vmatprep.subr.mxu0 0.0
      %437 = vmatpush1.msra.mxu0 0.0
      %438 = vmatprep.subr.mxu0 0.0
      %439 = vmatpush1.msra.mxu0 0.0
      %440 = vmatprep.subr.mxu0 0.0
      %441 = vmatpush1.msra.mxu0 0.0
      %442 = vmatprep.subr.mxu0 0.0
      %443 = vmatpush1.msra.mxu0 0.0
      %444 = vmatprep.subr.mxu0 0.0
      %445 = vmatpush1.msra.mxu0 0.0
      %446 = vmatprep.subr.mxu0 0.0
      %447 = vmatpush1.msra.mxu0 0.0
      %448 = vmatprep.subr.mxu0 0.0
      %449 = vmatpush1.msra.mxu0 0.0
      %450 = vmatprep.subr.mxu0 0.0
      %451 = vmatpush1.msra.mxu0 0.0
      %452 = vmatprep.subr.mxu0 0.0
      %453 = vmatpush1.msra.mxu0 0.0
      %454 = vmatprep.subr.mxu0 0.0
      %455 = vmatpush1.msra.mxu0 0.0
      %456 = vmatprep.subr.mxu0 0.0
      %457 = vmatpush1.msra.mxu0 0.0
      %458 = vmatprep.subr.mxu0 0.0
      %459 = vmatpush1.msra.mxu0 0.0
      %460 = vmatprep.subr.mxu0 0.0
      %461 = vmatpush1.msra.mxu0 0.0
      %462 = vmatprep.subr.mxu0 0.0
      %463 = vmatpush1.msra.mxu0 0.0
      %464 = vmatprep.subr.mxu0 0.0
      %465 = vmatpush1.msra.mxu0 0.0
      %466 = vmatprep.subr.mxu0 0.0
      %467 = vmatpush1.msra.mxu0 0.0
      %468 = vmatprep.subr.mxu0 0.0
      %469 = vmatpush1.msra.mxu0 0.0
      %470 = vmatprep.subr.mxu0 0.0
      %471 = vmatpush1.msra.mxu0 0.0
      %472 = vmatprep.subr.mxu0 0.0
      %473 = vmatpush1.msra.mxu0 0.0
      %474 = vmatprep.subr.mxu0 0.0
      %475 = vmatpush1.msra.mxu0 0.0
      %476 = vmatprep.subr.mxu0 0.0
      %477 = vmatpush1.msra.mxu0 0.0
      %478 = vmatprep.subr.mxu0 0.0
      %479 = vmatpush1.msra.mxu0 0.0
      %480 = vmatprep.subr.mxu0 0.0
      %481 = vmatpush1.msra.mxu0 0.0
      %482 = vmatprep.mubr.f32.mxu0 0.0
      %483 = vmatmul.mubr.f32.gmra.mrb[0].mxu0 %v409
      %v484 = vpop.f32.mrb[0].mxu0
      %v485 = vadd.f32 %v405, %v484
      %v486 = vpop.f32.mrb[0].mxu0
      %v487 = vadd.f32 %v405, %v486
      %488 = vdwg.mxu0
      %vm489 = vcmp.ge.f32.partialorder %v485, 0.0
      %vm490 = vcmp.ge.f32.partialorder %v487, 0.0
      %v491 = vmul.f32 %v485, 0.2
      %v492 = vmul.f32 %v487, 0.2
      %v493 = vsel %vm489, %v485, %v491
      %v494 = vsel %vm490, %v487, %v492
      %495 = vst [vmem:[%s197] sm:$0xff] %v493
      %496 = vst [vmem:[%s197 + $0x8] sm:$0xff] %v494
      %p497 = scmp.lt.s32.totalorder %s15, 1
      %s498 = scalar_select %p497, %s15, 1
      %s499 = smul.addr %s498, 2
      %s500 = smul.addr %s499, 8
      %s501 = scalar_lea.vmem %s4, %s500
      // Predicated region
      $region37: #{depthwise_conv.1} parent=35 // pred_check
        %p502 = pneg %p122
      $region38: #{depthwise_conv.1} parent=35 // pred_check_branch
        %504 = sbr.rel (%p502) target = $region40
      $region39: #{depthwise_conv.1} parent=35 // pred_region
        _
      $region40: #{depthwise_conv.1} parent=35 // pred_fallthru
        _
    $region36: #{depthwise_conv.1} parent=5 // pred_fallthru
      _
    %p505 = scmp.le.s32.totalorder 2, %s10
    // Predicated region
    $region41: #{depthwise_conv.1} parent=5 // pred_check
      %p506 = pneg %p505
    $region42: #{depthwise_conv.1} parent=5 // pred_check_branch
      %508 = sbr.rel (%p506) target = $region44
    $region43: #{depthwise_conv.1} parent=5 // pred_region
      %s509 = ssub.s32 %s10, 2
      // Predicated region
      $region45: #{depthwise_conv.1} parent=43 // pred_check
        %p510 = pneg %p128
      $region46: #{depthwise_conv.1} parent=43 // pred_check_branch
        %512 = sbr.rel (%p510) target = $region48
      $region47: #{depthwise_conv.1} parent=43 // pred_region
        %p513 = scmp.lt.s32.totalorder %s16, 1
        %s514 = scalar_select %p513, %s16, 1
        %s515 = smul.addr %s514, 2
        %s516 = smul.addr %s515, 8
        %s517 = scalar_lea.vmem %s4, %s516
      $region48: #{depthwise_conv.1} parent=43 // pred_fallthru
        _
    $region44: #{depthwise_conv.1} parent=5 // pred_fallthru
      _
  $region6: #{depthwise_conv.1} parent=0 // loop_footer
    %s14 = sadd.s32 1, %s10
  $region7: #{depthwise_conv.1} parent=0 // loop_footer_branch
    %9 = sbr.rel target = $region3
  $region8: #{depthwise_conv.1} parent=0 // loop_exit
    _

</llo_original>
